<compile_context>
chip_gen: v5e
topology: v5e:2x2
jax: 0.10.0
libtpu: 0.0.40
codegen_flags: <defaults>
</compile_context>

<pallas_src>
import functools

import jax
import jax.numpy as jnp
from jax.experimental import pallas as pl
from jax.experimental.pallas import tpu as pltpu


# ----------------------------- Pallas kernel --------------------------------
def _seconv_kernel(x_ref, w_ref, b_ref, o_ref, acc_ref, *, kh, sh, dh, oh):
    # x_ref  : (nb, Hp, Wp*Cin)        padded input rows (lane dim = Wp*Cin), f32
    # w_ref  : (KH, Wp*Cin, OW*Cout)   folded block-structured weights
    # b_ref  : (1, OW*Cout)            bias tiled across OW (zeros if module has no bias)
    # o_ref  : (nb, OH, OW*Cout)       lane-dense output block
    # acc_ref: (nb*OH, OW*Cout)        f32 VMEM accumulator scratch
    S = jnp.float32(2.0 ** 15)         # bits = 16 -> 2**(bits-1)
    inv_S = jnp.float32(2.0 ** -15)

    # round_act_fixed_point: quantize each input element exactly ONCE, in place
    # (input blocks are private VMEM copies, so in-place writes are safe).
    x_ref[...] = (jnp.round(x_ref[...] * S) * inv_S).astype(x_ref.dtype)

    nb = x_ref.shape[0]
    kin = x_ref.shape[2]               # Wp * Cin
    nout = o_ref.shape[2]              # OW * Cout
    m = nb * oh

    acc_ref[...] = jnp.zeros_like(acc_ref)
    # Unrolled over the KH row-taps only: each iteration is one fat MXU matmul
    # (K = Wp*Cin, N = OW*Cout); KW/Cin/stride-w/dilation-w live in w_ref.
    for i in range(kh):
        rows = x_ref[:, i * dh:i * dh + (oh - 1) * sh + 1, :]
        if sh > 1:                     # static python branch (not hit in the test)
            rows = rows[:, ::sh, :]
        # reshape merges leading dims only (lane dim untouched) -> no relayout.
        acc_ref[...] += jnp.dot(rows.reshape(m, kin), w_ref[i],
                                preferred_element_type=jnp.float32)

    out = acc_ref[...] + b_ref[...]    # fused bias epilogue
    # split-leading-dim reshape only; store is full-lane (OW*Cout) dense.
    o_ref[...] = out.reshape(nb, oh, nout).astype(o_ref.dtype)


# ------------------------------- Wrapper -------------------------------------
def se_conv2d_forward(x, weight, bias=None, stride=(1, 1), padding=(0, 0),
                      dilation=(1, 1)):
    """SEConv2d.forward. x: (N, Cin, H, W) NCHW, weight: (Cout, Cin, KH, KW). Returns NCHW."""
    N, C, H, W = x.shape
    Cout, Cin, KH, KW = weight.shape
    assert Cin == C, "groups != 1 not supported"

    sh, sw = stride
    ph, pw = padding
    dh, dw = dilation
    OH = (H + 2 * ph - dh * (KH - 1) - 1) // sh + 1
    OW = (W + 2 * pw - dw * (KW - 1) - 1) // sw + 1
    Hp, Wp = H + 2 * ph, W + 2 * pw

    # NCHW -> (N, Hp, Wp*Cin): one cheap pass over the RAW input (no HBM im2col).
    x_rows = jnp.transpose(x, (0, 2, 3, 1)).astype(jnp.float32)
    x_rows = jnp.pad(x_rows, ((0, 0), (ph, ph), (pw, pw), (0, 0)))
    x_rows = x_rows.reshape(N, Hp, Wp * Cin)

    # Fold KW taps, Cin, stride-w and dilation-w into a block-structured weight:
    #   W_big[i, p*Cin + c, w*Cout + o] = W[o, c, i, j]  iff  p == w*sw + j*dw
    sel = (jnp.arange(Wp)[None, :, None]
           == (jnp.arange(OW)[None, None, :] * sw
               + jnp.arange(KW)[:, None, None] * dw)).astype(jnp.float32)   # (KW, Wp, OW)
    w_big = jnp.einsum('jpw,ocij->ipcwo', sel, weight.astype(jnp.float32))
    w_big = w_big.reshape(KH, Wp * Cin, OW * Cout)

    b_vec = (jnp.zeros((Cout,), jnp.float32) if bias is None
             else bias.reshape(Cout).astype(jnp.float32))
    b_big = jnp.tile(b_vec, (OW,)).reshape(1, OW * Cout)

    # --- block sizing from the REAL per-step VMEM footprint -------------------
    in_blk = Hp * Wp * Cin * 4
    out_blk = OH * OW * Cout * 4
    per_sample = 2 * in_blk + 2 * out_blk + out_blk      # dbl-buffered in/out + f32 acc
    fixed = 2 * KH * Wp * Cin * OW * Cout * 4 + 2 * OW * Cout * 4
    block_budget = 12 * 1024 * 1024                      # blocks per grid step
    avail = max(block_budget - fixed, per_sample)
    nb = max(1, min(N, avail // max(per_sample, 1)))
    if N >= 2:
        # Guarantee >= 2 grid steps so both v7x TensorCores get work (one extra
        # ~0.35us step on single-TC v5e/v6e is negligible).
        nb = min(nb, -(-N // 2))
    Np = -(-N // nb) * nb
    if Np != N:
        x_rows = jnp.pad(x_rows, ((0, Np - N), (0, 0), (0, 0)))
    grid = (Np // nb,)

    # Clamp to 56 MiB so the limit is legal on v7x (64 MiB physical VMEM) too.
    vmem_limit = int(min(56 * 2 ** 20,
                         max(32 * 2 ** 20, nb * per_sample + fixed + 4 * 2 ** 20)))

    kernel = functools.partial(_seconv_kernel, kh=KH, sh=sh, dh=dh, oh=OH)

    out = pl.pallas_call(
        kernel,
        out_shape=jax.ShapeDtypeStruct((Np, OH, OW * Cout), x.dtype),
        grid_spec=pltpu.PrefetchScalarGridSpec(
            num_scalar_prefetch=0,
            grid=grid,
            in_specs=[
                pl.BlockSpec((nb, Hp, Wp * Cin), lambda i: (i, 0, 0)),
                pl.BlockSpec((KH, Wp * Cin, OW * Cout), lambda i: (0, 0, 0)),
                pl.BlockSpec((1, OW * Cout), lambda i: (0, 0)),
            ],
            out_specs=pl.BlockSpec((nb, OH, OW * Cout), lambda i: (i, 0, 0)),
            scratch_shapes=[pltpu.VMEM((nb * OH, OW * Cout), jnp.float32)],
        ),
        compiler_params=pltpu.CompilerParams(
            dimension_semantics=("parallel",),
            vmem_limit_bytes=vmem_limit,
        ),
    )(x_rows, w_big, b_big)

    # (Np, OH, OW*Cout) has the same HBM layout as (Np, OH, OW, Cout); only the small
    # Cout-wide output is transposed back to the PyTorch NCHW layout.
    out = out[:N].reshape(N, OH, OW, Cout)
    return jnp.transpose(out, (0, 3, 1, 2))


# --------------------- Deterministic parameter init --------------------------
def init_se_conv2d_params(key, in_channels, out_channels, kernel_size,
                          threshold=0.005, sign_threshold=0.5):
    """Emulates SEConv2d.reset_parameters() with distribution='uniform':
       weight = sign(round(s, sign_threshold)) * 2 ** round(clamp(p, -min_p, 0))."""
    min_p = None
    for i in range(-10, 1):
        if 2.0 ** i >= threshold:
            min_p = -i
            break
    kp, ks = jax.random.split(key)
    shape = (out_channels, in_channels, kernel_size, kernel_size)
    p = jax.random.uniform(kp, shape, minval=-min_p - 0.5, maxval=-1 + 0.5)
    p = jnp.clip(p, -float(min_p), 0.0)
    p = jnp.round(p)
    s = jax.random.uniform(ks, shape, minval=-1.0, maxval=1.0)
    sign = jnp.where(s > sign_threshold, 1.0, jnp.where(s < -sign_threshold, -1.0, 0.0))
    weight = sign * (2.0 ** p)
    return weight.astype(jnp.float32)


# ------------------------------ Reference ------------------------------------
def _reference_forward(x, weight, stride, padding, dilation):
    S = 2.0 ** 15
    xq = jnp.round(x * S) / S                       # round_act_fixed_point, bits=16 (no clamp)
    return jax.lax.conv_general_dilated(
        xq, weight,
        window_strides=stride,
        padding=[(padding[0], padding[0]), (padding[1], padding[1])],
        rhs_dilation=dilation,
        dimension_numbers=("NCHW", "OIHW", "NCHW"),
    )


# --------------------------------- Main ---------------------------------------
if __name__ == "__main__":
    key = jax.random.PRNGKey(0)
    k_x, k_w = jax.random.split(key)

    N, Cin, H, W = 2, 4, 16, 16
    Cout, ksize = 8, 3
    stride, padding, dilation = (1, 1), (1, 1), (1, 1)

    x = jax.random.normal(k_x, (N, Cin, H, W), dtype=jnp.float32)
    weight = init_se_conv2d_params(k_w, Cin, Cout, ksize)

    fwd = jax.jit(functools.partial(se_conv2d_forward,
                                    stride=stride, padding=padding, dilation=dilation))
    out = jax.block_until_ready(fwd(x, weight))

    ref = jax.block_until_ready(_reference_forward(x, weight, stride, padding, dilation))
    assert out.shape == ref.shape
    assert jnp.max(jnp.abs(out - ref)) < 1e-4, "mismatch vs reference conv"

    print("KERNEL_OK")
</pallas_src>

<mosaic_0001>
module attributes {stable_mosaic.version = 11 : i64} {
  func.func @_seconv_kernel(%arg0: i32, %arg1: memref<1x18x72xf32, #tpu.memory_space<vmem>>, %arg2: memref<3x72x128xf32, #tpu.memory_space<vmem>>, %arg3: memref<1x128xf32, #tpu.memory_space<vmem>>, %arg4: memref<1x16x128xf32, #tpu.memory_space<vmem>>, %arg5: memref<16x128xf32, #tpu.memory_space<vmem>>) attributes {dimension_semantics = [#tpu.dimension_semantics<parallel>], iteration_bounds = array<i64: 2>, scalar_prefetch = 0 : i64, scratch_operands = 1 : i64, tpu.core_type = #tpu.core_type<tc>, window_params = [{transform_indices = @transform_0, window_bounds = array<i64: 1, 18, 72>}, {pipeline_mode = #tpu.pipeline_mode<synchronous>, transform_indices = @transform_1, window_bounds = array<i64: 3, 72, 128>}, {pipeline_mode = #tpu.pipeline_mode<synchronous>, transform_indices = @transform_2, window_bounds = array<i64: 1, 128>}, {transform_indices = @transform_3, window_bounds = array<i64: 1, 16, 128>}]} {
    %c0 = arith.constant 0 : index
    %c0_0 = arith.constant 0 : index
    %c0_1 = arith.constant 0 : index
    %0 = vector.load %arg1[%c0, %c0_0, %c0_1] : memref<1x18x72xf32, #tpu.memory_space<vmem>>, vector<1x18x72xf32>
    %cst = arith.constant 3.276800e+04 : f32
    %1 = vector.broadcast %cst : f32 to vector<1x18x72xf32>
    %2 = arith.mulf %0, %1 : vector<1x18x72xf32>
    %3 = math.roundeven %2 : vector<1x18x72xf32>
    %cst_2 = arith.constant 3.05175781E-5 : f32
    %4 = vector.broadcast %cst_2 : f32 to vector<1x18x72xf32>
    %5 = arith.mulf %3, %4 : vector<1x18x72xf32>
    %c0_3 = arith.constant 0 : index
    %c0_4 = arith.constant 0 : index
    %c0_5 = arith.constant 0 : index
    %6 = vector.load %arg1[%c0_3, %c0_4, %c0_5] : memref<1x18x72xf32, #tpu.memory_space<vmem>>, vector<1x18x72xf32>
    tpu.vector_store %arg1[%c0_3, %c0_4, %c0_5], %5 {strides = array<i32>} : memref<1x18x72xf32, #tpu.memory_space<vmem>>, vector<1x18x72xf32>,
    %cst_6 = arith.constant 0.000000e+00 : f32
    %7 = vector.broadcast %cst_6 : f32 to vector<16x128xf32>
    %c0_7 = arith.constant 0 : index
    %c0_8 = arith.constant 0 : index
    %8 = vector.load %arg5[%c0_7, %c0_8] : memref<16x128xf32, #tpu.memory_space<vmem>>, vector<16x128xf32>
    tpu.vector_store %arg5[%c0_7, %c0_8], %7 {strides = array<i32>} : memref<16x128xf32, #tpu.memory_space<vmem>>, vector<16x128xf32>,
    %c0_9 = arith.constant 0 : index
    %c0_10 = arith.constant 0 : index
    %c0_11 = arith.constant 0 : index
    %9 = vector.load %arg1[%c0_9, %c0_10, %c0_11] : memref<1x18x72xf32, #tpu.memory_space<vmem>>, vector<1x16x72xf32>
    %c0_12 = arith.constant 0 : index
    %c0_13 = arith.constant 0 : index
    %10 = vector.load %arg5[%c0_12, %c0_13] : memref<16x128xf32, #tpu.memory_space<vmem>>, vector<16x128xf32>
    %11 = vector.shape_cast %9 : vector<1x16x72xf32> to vector<16x72xf32>
    %c0_14 = arith.constant 0 : index
    %c0_15 = arith.constant 0 : index
    %c0_16 = arith.constant 0 : index
    %12 = vector.load %arg2[%c0_14, %c0_15, %c0_16] : memref<3x72x128xf32, #tpu.memory_space<vmem>>, vector<1x72x128xf32>
    %13 = vector.shape_cast %12 : vector<1x72x128xf32> to vector<72x128xf32>
    %cst_17 = arith.constant dense<0.000000e+00> : vector<16x128xf32>
    %14 = tpu.matmul %11, %13, %cst_17 {dimension_numbers = #tpu.dot_dimension_numbers<[1], [0], [0], [1], [0, 0, 1, 1], [], []>} : vector<16x72xf32>, vector<72x128xf32>, vector<16x128xf32> -> vector<16x128xf32>
    %15 = arith.addf %10, %14 : vector<16x128xf32>
    %c0_18 = arith.constant 0 : index
    %c0_19 = arith.constant 0 : index
    %16 = vector.load %arg5[%c0_18, %c0_19] : memref<16x128xf32, #tpu.memory_space<vmem>>, vector<16x128xf32>
    tpu.vector_store %arg5[%c0_18, %c0_19], %15 {strides = array<i32>} : memref<16x128xf32, #tpu.memory_space<vmem>>, vector<16x128xf32>,
    %c0_20 = arith.constant 0 : index
    %c1 = arith.constant 1 : index
    %c0_21 = arith.constant 0 : index
    %17 = vector.load %arg1[%c0_20, %c1, %c0_21] : memref<1x18x72xf32, #tpu.memory_space<vmem>>, vector<1x16x72xf32>
    %c0_22 = arith.constant 0 : index
    %c0_23 = arith.constant 0 : index
    %18 = vector.load %arg5[%c0_22, %c0_23] : memref<16x128xf32, #tpu.memory_space<vmem>>, vector<16x128xf32>
    %19 = vector.shape_cast %17 : vector<1x16x72xf32> to vector<16x72xf32>
    %c1_24 = arith.constant 1 : index
    %c0_25 = arith.constant 0 : index
    %c0_26 = arith.constant 0 : index
    %20 = vector.load %arg2[%c1_24, %c0_25, %c0_26] : memref<3x72x128xf32, #tpu.memory_space<vmem>>, vector<1x72x128xf32>
    %21 = vector.shape_cast %20 : vector<1x72x128xf32> to vector<72x128xf32>
    %cst_27 = arith.constant dense<0.000000e+00> : vector<16x128xf32>
    %22 = tpu.matmul %19, %21, %cst_27 {dimension_numbers = #tpu.dot_dimension_numbers<[1], [0], [0], [1], [0, 0, 1, 1], [], []>} : vector<16x72xf32>, vector<72x128xf32>, vector<16x128xf32> -> vector<16x128xf32>
    %23 = arith.addf %18, %22 : vector<16x128xf32>
    %c0_28 = arith.constant 0 : index
    %c0_29 = arith.constant 0 : index
    %24 = vector.load %arg5[%c0_28, %c0_29] : memref<16x128xf32, #tpu.memory_space<vmem>>, vector<16x128xf32>
    tpu.vector_store %arg5[%c0_28, %c0_29], %23 {strides = array<i32>} : memref<16x128xf32, #tpu.memory_space<vmem>>, vector<16x128xf32>,
    %c0_30 = arith.constant 0 : index
    %c2 = arith.constant 2 : index
    %c0_31 = arith.constant 0 : index
    %25 = vector.load %arg1[%c0_30, %c2, %c0_31] : memref<1x18x72xf32, #tpu.memory_space<vmem>>, vector<1x16x72xf32>
    %c0_32 = arith.constant 0 : index
    %c0_33 = arith.constant 0 : index
    %26 = vector.load %arg5[%c0_32, %c0_33] : memref<16x128xf32, #tpu.memory_space<vmem>>, vector<16x128xf32>
    %27 = vector.shape_cast %25 : vector<1x16x72xf32> to vector<16x72xf32>
    %c2_34 = arith.constant 2 : index
    %c0_35 = arith.constant 0 : index
    %c0_36 = arith.constant 0 : index
    %28 = vector.load %arg2[%c2_34, %c0_35, %c0_36] : memref<3x72x128xf32, #tpu.memory_space<vmem>>, vector<1x72x128xf32>
    %29 = vector.shape_cast %28 : vector<1x72x128xf32> to vector<72x128xf32>
    %cst_37 = arith.constant dense<0.000000e+00> : vector<16x128xf32>
    %30 = tpu.matmul %27, %29, %cst_37 {dimension_numbers = #tpu.dot_dimension_numbers<[1], [0], [0], [1], [0, 0, 1, 1], [], []>} : vector<16x72xf32>, vector<72x128xf32>, vector<16x128xf32> -> vector<16x128xf32>
    %31 = arith.addf %26, %30 : vector<16x128xf32>
    %c0_38 = arith.constant 0 : index
    %c0_39 = arith.constant 0 : index
    %32 = vector.load %arg5[%c0_38, %c0_39] : memref<16x128xf32, #tpu.memory_space<vmem>>, vector<16x128xf32>
    tpu.vector_store %arg5[%c0_38, %c0_39], %31 {strides = array<i32>} : memref<16x128xf32, #tpu.memory_space<vmem>>, vector<16x128xf32>,
    %c0_40 = arith.constant 0 : index
    %c0_41 = arith.constant 0 : index
    %33 = vector.load %arg5[%c0_40, %c0_41] : memref<16x128xf32, #tpu.memory_space<vmem>>, vector<16x128xf32>
    %c0_42 = arith.constant 0 : index
    %c0_43 = arith.constant 0 : index
    %34 = vector.load %arg3[%c0_42, %c0_43] : memref<1x128xf32, #tpu.memory_space<vmem>>, vector<1x128xf32>
    %35 = vector.broadcast %34 : vector<1x128xf32> to vector<16x128xf32>
    %36 = arith.addf %33, %35 : vector<16x128xf32>
    %37 = vector.shape_cast %36 : vector<16x128xf32> to vector<1x16x128xf32>
    %c0_44 = arith.constant 0 : index
    %c0_45 = arith.constant 0 : index
    %c0_46 = arith.constant 0 : index
    %38 = vector.load %arg4[%c0_44, %c0_45, %c0_46] : memref<1x16x128xf32, #tpu.memory_space<vmem>>, vector<1x16x128xf32>
    tpu.vector_store %arg4[%c0_44, %c0_45, %c0_46], %37 {strides = array<i32>} : memref<1x16x128xf32, #tpu.memory_space<vmem>>, vector<1x16x128xf32>,
    return
  }
  func.func @transform_0(%arg0: i32) -> (i32, i32, i32) {
    %c0_i32 = arith.constant 0 : i32
    %c0_i32_0 = arith.constant 0 : i32
    %c0_i32_1 = arith.constant 0 : i32
    return %arg0, %c0_i32, %c0_i32_0 : i32, i32, i32
  }
  func.func @transform_1(%arg0: i32) -> (i32, i32, i32) {
    %c0_i32 = arith.constant 0 : i32
    %c0_i32_0 = arith.constant 0 : i32
    %c0_i32_1 = arith.constant 0 : i32
    %c0_i32_2 = arith.constant 0 : i32
    return %c0_i32, %c0_i32_0, %c0_i32_1 : i32, i32, i32
  }
  func.func @transform_2(%arg0: i32) -> (i32, i32) {
    %c0_i32 = arith.constant 0 : i32
    %c0_i32_0 = arith.constant 0 : i32
    %c0_i32_1 = arith.constant 0 : i32
    return %c0_i32, %c0_i32_0 : i32, i32
  }
  func.func @transform_3(%arg0: i32) -> (i32, i32, i32) {
    %c0_i32 = arith.constant 0 : i32
    %c0_i32_0 = arith.constant 0 : i32
    %c0_i32_1 = arith.constant 0 : i32
    return %arg0, %c0_i32, %c0_i32_0 : i32, i32, i32
  }
}

</mosaic_0001>

<llo_original>
// kernel: tile.1
$region0: #{tile.1}
  #allocation0 [shape = 's32[1]{0}', space=sflag, size = 0x4, scoped, tag = 'scoped memory for tile.1']
  %s0 = inlined_call_operand.<no memory space> [shape: f32[], index: 0, kind: input, shape index: {}]
  %s1 = inlined_call_operand.vmem [shape: f32[1,128], index: 1, kind: output, shape index: {}]
  %v2 = vstv %s0
  %3 = vst [vmem:[%s1] sm:$0x1] %v2

// kernel: se_conv2d_forward.1
$region0: #{se_conv2d_forward.1}
  #allocation0 [shape = 'u32[]', space=smem, size = 0x4, offset = 0x4, fixed_abs, tag = 'smem constant byte address 0x4 - core index']
  #allocation1 [shape = 'u32[72,128]{1,0:T(1,128)}', space=vmem, size = 0x9000, scoped, tag = 'internal scratch']
  #allocation2 [shape = 'f32[16,128]{1,0:T(8,128)}', space=vmem, size = 0x2000, scoped, tag = 'scratch operand']
  %s0 = inlined_call_operand.vmem [shape: f32[2,18,72], index: 0, kind: input, shape index: {}]
  %s1 = inlined_call_operand.vmem [shape: f32[3,72,128], index: 1, kind: input, shape index: {}]
  %s2 = inlined_call_operand.vmem [shape: f32[1,128], index: 2, kind: input, shape index: {}]
  %s3 = inlined_call_operand.vmem [shape: f32[2,16,128], index: 3, kind: output, shape index: {}]
  %s4 = sld [smem:[#allocation0]]
  $region45: #{se_conv2d_forward.1} parent=0
    _
  %s6 = ssub.s32 1, %s4
  %s7 = scalar_select 0, %s6, %s4
  loop: start=0, step=1, limit=4
  $region2: #{se_conv2d_forward.1} parent=0 // loop_pre_header
    _
  $region3: #{se_conv2d_forward.1} parent=0 // loop_header
    %s9 = sphi 0, %s13
    %p10 = scmp.ge.s32.totalorder %s9, 4
    %s19 = sphi 0, %s21
    %s22 = sphi 0, %s19
    %s23 = sphi 0, %s22
    %s39 = sphi 0, %s23
    %s43 = sphi 0, %s43
    %s45 = sphi 0, %s43
    %s46 = sphi 0, %s45
    %s60 = sphi 0, %s46
    %s64 = sphi 0, %s64
    %s66 = sphi 0, %s64
    %s67 = sphi 0, %s66
    %s81 = sphi 0, %s67
    %s87 = sphi 0, %s89
    %s90 = sphi 0, %s87
    %s91 = sphi 0, %s90
    %s107 = sphi 0, %s91
  $region4: #{se_conv2d_forward.1} parent=0 // loop_header_branch
    %12 = sbr.rel (%p10) target = $region8
  $region5: #{se_conv2d_forward.1} parent=0 // loop_body
    %s14 = ssub.s32 %s9, 1
    %s15 = ssub.s32 %s9, 2
    %s16 = sadd.s32 %s9, 1
    %s17 = ssub.s32 %s9, %s16
    %p18 = scmp.eq.s32.totalorder %s17, 0
    %s20 = sadd.s32 %s19, 1
    %s21 = scalar_select %p18, %s19, %s20
    %p24 = pneg %p18
    %p25 = scmp.eq.s32.totalorder %s9, 1
    %p26 = por %p24, %p25
    %p27 = scmp.ne.s32.totalorder %s19, %s22
    %p28 = scmp.eq.s32.totalorder %s9, 0
    %p29 = por %p27, %p28
    %p30 = scmp.ne.s32.totalorder %s19, %s22
    %p31 = scmp.eq.s32.totalorder %s14, 1
    %p32 = por %p30, %p31
    %p33 = scmp.ne.s32.totalorder %s22, %s23
    %p34 = scmp.eq.s32.totalorder %s14, 0
    %p35 = por %p33, %p34
    %p36 = scmp.ne.s32.totalorder %s22, %s23
    %p37 = scmp.eq.s32.totalorder %s15, 1
    %p38 = por %p36, %p37
    %p40 = scmp.ne.s32.totalorder %s23, %s39
    %p41 = scmp.eq.s32.totalorder %s15, 0
    %p42 = por %p40, %p41
    %s44 = sadd.s32 %s43, 1
    %p47 = scmp.eq.s32.totalorder %s9, 1
    %p48 = scmp.ne.s32.totalorder %s43, %s45
    %p49 = scmp.eq.s32.totalorder %s9, 0
    %p50 = por %p48, %p49
    %p51 = scmp.ne.s32.totalorder %s43, %s45
    %p52 = scmp.eq.s32.totalorder %s14, 1
    %p53 = por %p51, %p52
    %p54 = scmp.ne.s32.totalorder %s45, %s46
    %p55 = scmp.eq.s32.totalorder %s14, 0
    %p56 = por %p54, %p55
    %p57 = scmp.ne.s32.totalorder %s45, %s46
    %p58 = scmp.eq.s32.totalorder %s15, 1
    %p59 = por %p57, %p58
    %p61 = scmp.ne.s32.totalorder %s46, %s60
    %p62 = scmp.eq.s32.totalorder %s15, 0
    %p63 = por %p61, %p62
    %s65 = sadd.s32 %s64, 1
    %p68 = scmp.eq.s32.totalorder %s9, 1
    %p69 = scmp.ne.s32.totalorder %s64, %s66
    %p70 = scmp.eq.s32.totalorder %s9, 0
    %p71 = por %p69, %p70
    %p72 = scmp.ne.s32.totalorder %s64, %s66
    %p73 = scmp.eq.s32.totalorder %s14, 1
    %p74 = por %p72, %p73
    %p75 = scmp.ne.s32.totalorder %s66, %s67
    %p76 = scmp.eq.s32.totalorder %s14, 0
    %p77 = por %p75, %p76
    %p78 = scmp.ne.s32.totalorder %s66, %s67
    %p79 = scmp.eq.s32.totalorder %s15, 1
    %p80 = por %p78, %p79
    %p82 = scmp.ne.s32.totalorder %s67, %s81
    %p83 = scmp.eq.s32.totalorder %s15, 0
    %p84 = por %p82, %p83
    %s85 = ssub.s32 %s9, %s16
    %p86 = scmp.eq.s32.totalorder %s85, 0
    %s88 = sadd.s32 %s87, 1
    %s89 = scalar_select %p86, %s87, %s88
    %p92 = pneg %p86
    %p93 = scmp.eq.s32.totalorder %s9, 1
    %p94 = por %p92, %p93
    %p95 = scmp.ne.s32.totalorder %s87, %s90
    %p96 = scmp.eq.s32.totalorder %s9, 0
    %p97 = por %p95, %p96
    %p98 = scmp.ne.s32.totalorder %s87, %s90
    %p99 = scmp.eq.s32.totalorder %s14, 1
    %p100 = por %p98, %p99
    %p101 = scmp.ne.s32.totalorder %s90, %s91
    %p102 = scmp.eq.s32.totalorder %s14, 0
    %p103 = por %p101, %p102
    %p104 = scmp.ne.s32.totalorder %s90, %s91
    %p105 = scmp.eq.s32.totalorder %s15, 1
    %p106 = por %p104, %p105
    %p108 = scmp.ne.s32.totalorder %s91, %s107
    %p109 = scmp.eq.s32.totalorder %s15, 0
    %p110 = por %p108, %p109
    %p111 = scmp.le.s32.totalorder 1, %s9
    %p112 = scmp.lt.s32.totalorder %s9, 3
    %p113 = pnand %p111, %p112
    %p114 = pneg %p113
    // Predicated region
    $region9: #{se_conv2d_forward.1} parent=5 // pred_check
      _
    $region10: #{se_conv2d_forward.1} parent=5 // pred_check_branch
      %116 = sbr.rel (%p113) target = $region12
    $region11: #{se_conv2d_forward.1} parent=5 // pred_region
      %s117 = ssub.s32 %s9, 1
      // Predicated region
      $region13: #{se_conv2d_forward.1} parent=11 // pred_check
        %p118 = pneg %p56
      $region14: #{se_conv2d_forward.1} parent=11 // pred_check_branch
        %120 = sbr.rel (%p118) target = $region16
      $region15: #{se_conv2d_forward.1} parent=11 // pred_region
        _
      $region16: #{se_conv2d_forward.1} parent=11 // pred_fallthru
        _
      // Predicated region
      $region17: #{se_conv2d_forward.1} parent=11 // pred_check
        %p121 = pneg %p77
      $region18: #{se_conv2d_forward.1} parent=11 // pred_check_branch
        %123 = sbr.rel (%p121) target = $region20
      $region19: #{se_conv2d_forward.1} parent=11 // pred_region
        _
      $region20: #{se_conv2d_forward.1} parent=11 // pred_fallthru
        _
    $region12: #{se_conv2d_forward.1} parent=5 // pred_fallthru
      _
    %p124 = scmp.lt.s32.totalorder %s9, 2
    // Predicated region
    $region21: #{se_conv2d_forward.1} parent=5 // pred_check
      %p125 = pneg %p124
    $region22: #{se_conv2d_forward.1} parent=5 // pred_check_branch
      %127 = sbr.rel (%p125) target = $region24
    $region23: #{se_conv2d_forward.1} parent=5 // pred_region
      // Predicated region
      $region25: #{se_conv2d_forward.1} parent=23 // pred_check
        %p128 = pneg %p29
      $region26: #{se_conv2d_forward.1} parent=23 // pred_check_branch
        %130 = sbr.rel (%p128) target = $region28
      $region27: #{se_conv2d_forward.1} parent=23 // pred_region
        %p131 = scmp.lt.s32.totalorder %s9, 1
        %s132 = scalar_select %p131, %s9, 1
        %s133 = smul.addr %s132, 3
        %s134 = smul.addr %s133, 8
        %s135 = scalar_lea.vmem %s0, %s134
      $region28: #{se_conv2d_forward.1} parent=23 // pred_fallthru
        _
    $region24: #{se_conv2d_forward.1} parent=5 // pred_fallthru
      _
    %p136 = scmp.le.s32.totalorder 1, %s9
    %p137 = scmp.lt.s32.totalorder %s9, 3
    %p138 = pnand %p136, %p137
    %p139 = pneg %p138
    // Predicated region
    $region29: #{se_conv2d_forward.1} parent=5 // pred_check
      _
    $region30: #{se_conv2d_forward.1} parent=5 // pred_check_branch
      %141 = sbr.rel (%p138) target = $region32
    $region31: #{se_conv2d_forward.1} parent=5 // pred_region
      %s142 = ssub.s32 %s9, 1
      %p143 = scmp.lt.s32.totalorder %s14, 1
      %s144 = scalar_select %p143, %s14, 1
      %s145 = smul.addr %s144, 3
      %s146 = smul.addr %s145, 8
      %s147 = scalar_lea.vmem %s0, %s146
      %p148 = pneg %p35
      %p149 = pneg %p32
      %p150 = pneg %p56
      %p151 = pneg %p53
      %p152 = pneg %p77
      %p153 = pneg %p74
      %p154 = pneg %p103
      %p155 = pneg %p100
      %p156 = scmp.lt.s32.totalorder %s14, 1
      %s157 = scalar_select %p156, %s14, 1
      %s158 = smul.addr %s157, 2
      %s159 = smul.addr %s158, 8
      %s160 = scalar_lea.vmem %s3, %s159
      %p161 = scmp.lt.s32.totalorder %s14, 1
      %s162 = scalar_select %p161, %s14, 1
      %s163 = smul.addr %s162, 3
      %s164 = smul.addr %s163, 8
      %s165 = scalar_lea.vmem %s0, %s164
      %p166 = scmp.lt.s32.totalorder %s14, 1
      %s167 = scalar_select %p166, %s14, 1
      %s168 = smul.addr %s167, 2
      %s169 = smul.addr %s168, 8
      %s170 = scalar_lea.vmem %s3, %s169
      %v171 = vld [vmem:[%s165] sm:$0xff]
      %v172 = vld [vmem:[%s165 + $0x8] sm:$0xff]
      %v173 = vld [vmem:[%s165 + $0x10] sm:$0x3]
      %v174 = vmul.f32 %v171, 32768.0
      %v175 = vmul.f32 %v172, 32768.0
      %v176 = vmul.f32 %v173, 32768.0
      %v177 = vround.ne.pseudo %v174
      %v178 = vround.ne.pseudo %v175
      %v179 = vround.ne.pseudo %v176
      %v180 = vmul.f32 %v177, 3.0517578e-05
      %v181 = vmul.f32 %v178, 3.0517578e-05
      %v182 = vmul.f32 %v179, 3.0517578e-05
      %vm183 = vcmask 588800
      %184 = vst.msk [vmem:[%s165] sm:$0xff] %vm183, %v180
      %185 = vst.msk [vmem:[%s165 + $0x8] sm:$0xff] %vm183, %v181
      %vm186 = vcmask 582656
      %187 = vst.msk [vmem:[%s165 + $0x10] sm:$0x3] %vm186, %v182
      %188 = vst [vmem:[#allocation2] sm:$0xff] 0.0
      %189 = vst [vmem:[#allocation2 + $0x8] sm:$0xff] 0.0
      %v190 = vld [vmem:[%s165] sm:$0xff]
      %v191 = vld [vmem:[%s165 + $0x8] sm:$0xff]
      %v192 = vld [vmem:[#allocation2] sm:$0xff]
      %v193 = vld [vmem:[#allocation2 + $0x8] sm:$0xff]
      %v194 = vld [vmem:[%s1] sm:$0xff]
      %v195 = vld [vmem:[%s1 + $0x8] sm:$0xff]
      %v196 = vld [vmem:[%s1 + $0x10] sm:$0xff]
      %v197 = vld [vmem:[%s1 + $0x18] sm:$0xff]
      %v198 = vld [vmem:[%s1 + $0x20] sm:$0xff]
      %v199 = vld [vmem:[%s1 + $0x28] sm:$0xff]
      %v200 = vld [vmem:[%s1 + $0x30] sm:$0xff]
      %v201 = vld [vmem:[%s1 + $0x38] sm:$0xff]
      %v202 = vld [vmem:[%s1 + $0x40] sm:$0xff]
      %v204 = vsel %vm183, %v190, 0
      %v207 = vsel %vm183, %v191, 0
      %209 = vmatpush.msra.mxu0 0.0
      %210 = vmatpush.msra.mxu0 0.0
      %211 = vmatpush.msra.mxu0 0.0
      %212 = vmatpush.msra.mxu0 0.0
      %213 = vmatpush.msra.mxu0 0.0
      %214 = vmatpush.msra.mxu0 0.0
      %215 = vmatpush.msra.mxu0 0.0
      %216 = vmatpush.msra.mxu0 %v202
      %217 = vmatpush.msra.mxu0 %v201
      %218 = vmatpush.msra.mxu0 %v200
      %219 = vmatpush.msra.mxu0 %v199
      %220 = vmatpush.msra.mxu0 %v198
      %221 = vmatpush.msra.mxu0 %v197
      %222 = vmatpush.msra.mxu0 %v196
      %223 = vmatpush.msra.mxu0 %v195
      %224 = vmatpush.msra.mxu0 %v194
      %225 = vmatmul.f32.gmra.mxu0 %v204
      %v226 = vpop.f32.mrf.mxu0
      %v227 = vadd.f32 0.0, %v226
      %228 = vmatmul.f32.gmra.mxu0 %v207
      %v229 = vpop.f32.mrf.mxu0
      %v230 = vadd.f32 0.0, %v229
      %231 = vdwg.mxu0
      %v232 = vadd.f32 %v192, %v227
      %v233 = vadd.f32 %v193, %v230
      %234 = vst [vmem:[#allocation2] sm:$0xff] %v232
      %235 = vst [vmem:[#allocation2 + $0x8] sm:$0xff] %v233
      %v236 = vld [vmem:[%s165 + $0x1] sm:$0xff]
      %v237 = vld [vmem:[%s165 + $0x9] sm:$0xff]
      %v238 = vld [vmem:[#allocation2] sm:$0xff]
      %v239 = vld [vmem:[#allocation2 + $0x8] sm:$0xff]
      %s240 = scalar_lea.vmem %s1, 72
      %v241 = vld [vmem:[%s240] sm:$0xff]
      %v242 = vld [vmem:[%s240 + $0x8] sm:$0xff]
      %v243 = vld [vmem:[%s240 + $0x10] sm:$0xff]
      %v244 = vld [vmem:[%s240 + $0x18] sm:$0xff]
      %v245 = vld [vmem:[%s240 + $0x20] sm:$0xff]
      %v246 = vld [vmem:[%s240 + $0x28] sm:$0xff]
      %v247 = vld [vmem:[%s240 + $0x30] sm:$0xff]
      %v248 = vld [vmem:[%s240 + $0x38] sm:$0xff]
      %v249 = vld [vmem:[%s240 + $0x40] sm:$0xff]
      %v251 = vsel %vm183, %v236, 0
      %v254 = vsel %vm183, %v237, 0
      %256 = vmatpush.msra.mxu0 0.0
      %257 = vmatpush.msra.mxu0 0.0
      %258 = vmatpush.msra.mxu0 0.0
      %259 = vmatpush.msra.mxu0 0.0
      %260 = vmatpush.msra.mxu0 0.0
      %261 = vmatpush.msra.mxu0 0.0
      %262 = vmatpush.msra.mxu0 0.0
      %263 = vmatpush.msra.mxu0 %v249
      %264 = vmatpush.msra.mxu0 %v248
      %265 = vmatpush.msra.mxu0 %v247
      %266 = vmatpush.msra.mxu0 %v246
      %267 = vmatpush.msra.mxu0 %v245
      %268 = vmatpush.msra.mxu0 %v244
      %269 = vmatpush.msra.mxu0 %v243
      %270 = vmatpush.msra.mxu0 %v242
      %271 = vmatpush.msra.mxu0 %v241
      %272 = vmatmul.f32.gmra.mxu0 %v251
      %v273 = vpop.f32.mrf.mxu0
      %v274 = vadd.f32 0.0, %v273
      %275 = vmatmul.f32.gmra.mxu0 %v254
      %v276 = vpop.f32.mrf.mxu0
      %v277 = vadd.f32 0.0, %v276
      %278 = vdwg.mxu0
      %v279 = vadd.f32 %v238, %v274
      %v280 = vadd.f32 %v239, %v277
      %281 = vst [vmem:[#allocation2] sm:$0xff] %v279
      %282 = vst [vmem:[#allocation2 + $0x8] sm:$0xff] %v280
      %v283 = vld [vmem:[%s165 + $0x2] sm:$0xff]
      %v284 = vld [vmem:[%s165 + $0xa] sm:$0xff]
      %v285 = vld [vmem:[#allocation2] sm:$0xff]
      %v286 = vld [vmem:[#allocation2 + $0x8] sm:$0xff]
      %s287 = scalar_lea.vmem %s1, 144
      %v288 = vld [vmem:[%s287] sm:$0xff]
      %v289 = vld [vmem:[%s287 + $0x8] sm:$0xff]
      %v290 = vld [vmem:[%s287 + $0x10] sm:$0xff]
      %v291 = vld [vmem:[%s287 + $0x18] sm:$0xff]
      %v292 = vld [vmem:[%s287 + $0x20] sm:$0xff]
      %v293 = vld [vmem:[%s287 + $0x28] sm:$0xff]
      %v294 = vld [vmem:[%s287 + $0x30] sm:$0xff]
      %v295 = vld [vmem:[%s287 + $0x38] sm:$0xff]
      %v296 = vld [vmem:[%s287 + $0x40] sm:$0xff]
      %v298 = vsel %vm183, %v283, 0
      %v301 = vsel %vm183, %v284, 0
      %303 = vmatpush.msra.mxu0 0.0
      %304 = vmatpush.msra.mxu0 0.0
      %305 = vmatpush.msra.mxu0 0.0
      %306 = vmatpush.msra.mxu0 0.0
      %307 = vmatpush.msra.mxu0 0.0
      %308 = vmatpush.msra.mxu0 0.0
      %309 = vmatpush.msra.mxu0 0.0
      %310 = vmatpush.msra.mxu0 %v296
      %311 = vmatpush.msra.mxu0 %v295
      %312 = vmatpush.msra.mxu0 %v294
      %313 = vmatpush.msra.mxu0 %v293
      %314 = vmatpush.msra.mxu0 %v292
      %315 = vmatpush.msra.mxu0 %v291
      %316 = vmatpush.msra.mxu0 %v290
      %317 = vmatpush.msra.mxu0 %v289
      %318 = vmatpush.msra.mxu0 %v288
      %319 = vmatmul.f32.gmra.mxu0 %v298
      %v320 = vpop.f32.mrf.mxu0
      %v321 = vadd.f32 0.0, %v320
      %322 = vmatmul.f32.gmra.mxu0 %v301
      %v323 = vpop.f32.mrf.mxu0
      %v324 = vadd.f32 0.0, %v323
      %325 = vdwg.mxu0
      %v326 = vadd.f32 %v285, %v321
      %v327 = vadd.f32 %v286, %v324
      %328 = vst [vmem:[#allocation2] sm:$0xff] %v326
      %329 = vst [vmem:[#allocation2 + $0x8] sm:$0xff] %v327
      %v330 = vld [vmem:[#allocation2] sm:$0xff]
      %v331 = vld [vmem:[#allocation2 + $0x8] sm:$0xff]
      %v332 = vld [vmem:[%s2] sm:$0x1]
      %v334 = vperm.slane %v332, 0
      %v336 = vadd.f32 %v330, %v334
      %v337 = vadd.f32 %v331, %v334
      %338 = vst [vmem:[%s170] sm:$0xff] %v336
      %339 = vst [vmem:[%s170 + $0x8] sm:$0xff] %v337
      %p340 = scmp.lt.s32.totalorder %s14, 1
      %s341 = scalar_select %p340, %s14, 1
      %s342 = smul.addr %s341, 2
      %s343 = smul.addr %s342, 8
      %s344 = scalar_lea.vmem %s3, %s343
      // Predicated region
      $region33: #{se_conv2d_forward.1} parent=31 // pred_check
        %p345 = pneg %p100
      $region34: #{se_conv2d_forward.1} parent=31 // pred_check_branch
        %347 = sbr.rel (%p345) target = $region36
      $region35: #{se_conv2d_forward.1} parent=31 // pred_region
        _
      $region36: #{se_conv2d_forward.1} parent=31 // pred_fallthru
        _
    $region32: #{se_conv2d_forward.1} parent=5 // pred_fallthru
      _
    %p348 = scmp.le.s32.totalorder 2, %s9
    // Predicated region
    $region37: #{se_conv2d_forward.1} parent=5 // pred_check
      %p349 = pneg %p348
    $region38: #{se_conv2d_forward.1} parent=5 // pred_check_branch
      %351 = sbr.rel (%p349) target = $region40
    $region39: #{se_conv2d_forward.1} parent=5 // pred_region
      %s352 = ssub.s32 %s9, 2
      // Predicated region
      $region41: #{se_conv2d_forward.1} parent=39 // pred_check
        %p353 = pneg %p106
      $region42: #{se_conv2d_forward.1} parent=39 // pred_check_branch
        %355 = sbr.rel (%p353) target = $region44
      $region43: #{se_conv2d_forward.1} parent=39 // pred_region
        %p356 = scmp.lt.s32.totalorder %s15, 1
        %s357 = scalar_select %p356, %s15, 1
        %s358 = smul.addr %s357, 2
        %s359 = smul.addr %s358, 8
        %s360 = scalar_lea.vmem %s3, %s359
      $region44: #{se_conv2d_forward.1} parent=39 // pred_fallthru
        _
    $region40: #{se_conv2d_forward.1} parent=5 // pred_fallthru
      _
  $region6: #{se_conv2d_forward.1} parent=0 // loop_footer
    %s13 = sadd.s32 1, %s9
  $region7: #{se_conv2d_forward.1} parent=0 // loop_footer_branch
    %8 = sbr.rel target = $region3
  $region8: #{se_conv2d_forward.1} parent=0 // loop_exit
    _

</llo_original>
